<compile_context>
chip_gen: v6e
topology: v6e:2x2x1
jax: 0.10.0
libtpu: 0.0.40
codegen_flags: <defaults>
</compile_context>

<pallas_src>
import math

import jax
import jax.numpy as jnp
from jax import lax
from jax.experimental import pallas as pl
from jax.experimental.pallas import tpu as pltpu


def _attention_kernel(data_ref, bias_ref, wqkv_ref, bqkv_ref, o_ref):
    # data_ref : [TB, S, D]  input block for TB batch elements
    # bias_ref : [TB, 1, S]  additive key-mask bias (0 valid, -1e9 masked)
    # wqkv_ref : [3D, D]     fused QKV weight in PyTorch (out, in) layout
    # bqkv_ref : [1, 3D]     fused QKV bias
    # o_ref    : [TB, S, D]
    tb, s, d = data_ref.shape

    # Flatten batch*seq so the fused projection is a single wide MXU matmul.
    x = data_ref[...].reshape(tb * s, d)                     # [TB*S, D]

    # One fused projection: contract the "in" dims of x and the PyTorch-layout
    # weight directly (no transpose, handled natively by the MXU).
    qkv = lax.dot_general(
        x, wqkv_ref[...],
        dimension_numbers=(((1,), (1,)), ((), ())),
        preferred_element_type=jnp.float32,
    ) + bqkv_ref[...]                                        # [TB*S, 3D]

    q = qkv[:, 0 * d:1 * d].reshape(tb, s, d)
    k = qkv[:, 1 * d:2 * d].reshape(tb, s, d)
    v = qkv[:, 2 * d:3 * d].reshape(tb, s, d)

    # Batched QK^T, contracting the head dims (no in-kernel transpose / XLU).
    scores = jnp.einsum('bqd,bkd->bqk', q, k,
                        preferred_element_type=jnp.float32)   # [TB, S, S]
    # Scale kept on the scores (same op order as the reference module; folding
    # it into q only saves S/D multiplies and perturbs MXU-pass rounding).
    scores = scores * (1.0 / math.sqrt(float(d)))
    # Additive mask bias: one VPU add instead of compare+select.
    scores = scores + bias_ref[...]                           # [TB,1,S] bcast

    # Softmax with post-PV normalization: divide S*D outputs, not S*S probs.
    m = jnp.max(scores, axis=-1, keepdims=True)
    e = jnp.exp(scores - m)
    l = jnp.sum(e, axis=-1, keepdims=True)
    out = jnp.einsum('bqk,bkd->bqd', e, v,
                     preferred_element_type=jnp.float32)      # [TB, S, D]
    # approx=True would route to the EUP (free slot) at reduced precision.
    inv_l = pl.reciprocal(l, approx=False)
    o_ref[...] = (out * inv_l).astype(o_ref.dtype)


def _pick_batch_block(batch, seq, target_rows=512):
    """Largest divisor of `batch` whose block has <= target_rows rows."""
    tb = 1
    for cand in range(1, batch + 1):
        if batch % cand == 0 and cand * seq <= target_rows:
            tb = cand
    # Prefer >=2 grid steps (2-TC megacore sharding on v7x) once blocks are
    # already reasonably large.
    while (batch // tb < 2 and tb > 1 and (tb // 2) * seq >= 128
           and batch % (tb // 2) == 0):
        tb //= 2
    return tb


def changed_value_attention(data, mask, wq, bq, wk, bk, wv, bv):
    """data: [B,S,D] f32; mask: [B,S] {0,1}; w*: [D,D] PyTorch (out,in); b*: [D]."""
    B, S, D = data.shape
    TB = _pick_batch_block(B, S)

    # Fused QKV parameters — a cheap concat, no transposes.
    w_qkv = jnp.concatenate([wq, wk, wv], axis=0)              # [3D, D]
    b_qkv = jnp.concatenate([bq, bk, bv], axis=0)[None, :]     # [1, 3D]

    # Additive mask bias shaped like PyTorch's mask.unsqueeze(1): [B, 1, S].
    mask_bias = ((mask.astype(jnp.float32) - 1.0) * 1e9)[:, None, :]

    grid_spec = pltpu.PrefetchScalarGridSpec(
        num_scalar_prefetch=0,
        grid=(B // TB,),
        in_specs=[
            pl.BlockSpec((TB, S, D), lambda b: (b, 0, 0)),     # data
            pl.BlockSpec((TB, 1, S), lambda b: (b, 0, 0)),     # mask bias
            pl.BlockSpec((3 * D, D), lambda b: (0, 0)),        # fused W_qkv
            pl.BlockSpec((1, 3 * D), lambda b: (0, 0)),        # fused b_qkv
        ],
        out_specs=pl.BlockSpec((TB, S, D), lambda b: (b, 0, 0)),
    )

    return pl.pallas_call(
        _attention_kernel,
        out_shape=jax.ShapeDtypeStruct((B, S, D), jnp.float32),
        grid_spec=grid_spec,
        compiler_params=pltpu.CompilerParams(
            dimension_semantics=("parallel",)),
    )(data, mask_bias, w_qkv, b_qkv)


def _reference(data, mask, wq, bq, wk, bk, wv, bv):
    # Pure-JAX replica of the PyTorch forward for validation.
    q = data @ wq.T + bq
    k = data @ wk.T + bk
    v = data @ wv.T + bv
    d_k = data.shape[-1]
    scores = (q @ jnp.swapaxes(k, -2, -1)) / math.sqrt(d_k)
    scores = jnp.where(mask[:, None, :] == 0, -1e9, scores)
    p = jax.nn.softmax(scores, axis=-1)
    return p @ v


if __name__ == "__main__":
    B, S, D = 2, 8, 32
    key = jax.random.PRNGKey(0)
    k_data, k_mask, k_wq, k_bq, k_wk, k_bk, k_wv, k_bv = jax.random.split(key, 8)

    data = jax.random.normal(k_data, (B, S, D), dtype=jnp.float32)
    mask = (jax.random.uniform(k_mask, (B, S)) > 0.3).astype(jnp.int32)
    # Guarantee at least one valid key per row (standard for attention masks;
    # keeps the additive-bias formulation exactly equivalent to masked_fill).
    mask = mask.at[:, 0].set(1)

    # Deterministic "Linear" parameters (PyTorch convention: W is (out, in)).
    bound = 1.0 / math.sqrt(D)
    wq = jax.random.uniform(k_wq, (D, D), minval=-bound, maxval=bound, dtype=jnp.float32)
    bq = jax.random.uniform(k_bq, (D,), minval=-bound, maxval=bound, dtype=jnp.float32)
    wk = jax.random.uniform(k_wk, (D, D), minval=-bound, maxval=bound, dtype=jnp.float32)
    bk = jax.random.uniform(k_bk, (D,), minval=-bound, maxval=bound, dtype=jnp.float32)
    wv = jax.random.uniform(k_wv, (D, D), minval=-bound, maxval=bound, dtype=jnp.float32)
    bv = jax.random.uniform(k_bv, (D,), minval=-bound, maxval=bound, dtype=jnp.float32)

    fn = jax.jit(changed_value_attention)
    out = jax.block_until_ready(fn(data, mask, wq, bq, wk, bk, wv, bv))

    ref = _reference(data, mask, wq, bq, wk, bk, wv, bv)
    assert out.shape == (B, S, D)
    # Tolerance covers TPU default matmul precision (bf16 passes) combined with
    # the post-PV normalization reordering; genuine bugs are orders larger.
    max_diff = float(jnp.max(jnp.abs(out - ref)))
    assert jnp.allclose(out, ref, atol=2e-3, rtol=2e-3), (
        f"mismatch vs reference: max|diff|={max_diff}")

    print("KERNEL_OK")
</pallas_src>

<mosaic_0001>
module attributes {stable_mosaic.version = 11 : i64} {
  func.func @_attention_kernel(%arg0: i32, %arg1: memref<2x8x32xf32, #tpu.memory_space<vmem>>, %arg2: memref<2x1x8xf32, #tpu.memory_space<vmem>>, %arg3: memref<96x32xf32, #tpu.memory_space<vmem>>, %arg4: memref<1x96xf32, #tpu.memory_space<vmem>>, %arg5: memref<2x8x32xf32, #tpu.memory_space<vmem>>) attributes {dimension_semantics = [#tpu.dimension_semantics<parallel>], iteration_bounds = array<i64: 1>, scalar_prefetch = 0 : i64, scratch_operands = 0 : i64, tpu.core_type = #tpu.core_type<tc>, window_params = [{transform_indices = @transform_0, window_bounds = array<i64: 2, 8, 32>}, {transform_indices = @transform_1, window_bounds = array<i64: 2, 1, 8>}, {pipeline_mode = #tpu.pipeline_mode<synchronous>, transform_indices = @transform_2, window_bounds = array<i64: 96, 32>}, {pipeline_mode = #tpu.pipeline_mode<synchronous>, transform_indices = @transform_3, window_bounds = array<i64: 1, 96>}, {transform_indices = @transform_4, window_bounds = array<i64: 2, 8, 32>}]} {
    %c0 = arith.constant 0 : index
    %c0_0 = arith.constant 0 : index
    %c0_1 = arith.constant 0 : index
    %0 = vector.load %arg1[%c0, %c0_0, %c0_1] : memref<2x8x32xf32, #tpu.memory_space<vmem>>, vector<2x8x32xf32>
    %1 = vector.shape_cast %0 : vector<2x8x32xf32> to vector<16x32xf32>
    %c0_2 = arith.constant 0 : index
    %c0_3 = arith.constant 0 : index
    %2 = vector.load %arg3[%c0_2, %c0_3] : memref<96x32xf32, #tpu.memory_space<vmem>>, vector<96x32xf32>
    %cst = arith.constant dense<0.000000e+00> : vector<16x96xf32>
    %3 = tpu.matmul %1, %2, %cst {dimension_numbers = #tpu.dot_dimension_numbers<[1], [1], [0], [0], [0, 0, 1, 0], [], []>} : vector<16x32xf32>, vector<96x32xf32>, vector<16x96xf32> -> vector<16x96xf32>
    %c0_4 = arith.constant 0 : index
    %c0_5 = arith.constant 0 : index
    %4 = vector.load %arg4[%c0_4, %c0_5] : memref<1x96xf32, #tpu.memory_space<vmem>>, vector<1x96xf32>
    %5 = vector.broadcast %4 : vector<1x96xf32> to vector<16x96xf32>
    %6 = arith.addf %3, %5 : vector<16x96xf32>
    %7 = vector.extract_strided_slice %6 {offsets = [0, 0], sizes = [16, 32], strides = [1, 1]} : vector<16x96xf32> to vector<16x32xf32>
    %8 = vector.shape_cast %7 : vector<16x32xf32> to vector<2x8x32xf32>
    %9 = vector.extract_strided_slice %6 {offsets = [0, 32], sizes = [16, 32], strides = [1, 1]} : vector<16x96xf32> to vector<16x32xf32>
    %10 = vector.shape_cast %9 : vector<16x32xf32> to vector<2x8x32xf32>
    %11 = vector.extract_strided_slice %6 {offsets = [0, 64], sizes = [16, 32], strides = [1, 1]} : vector<16x96xf32> to vector<16x32xf32>
    %12 = vector.shape_cast %11 : vector<16x32xf32> to vector<2x8x32xf32>
    "tpu.trace_start"() <{level = 10 : i32, message = "bqd,bkd->bqk"}> : () -> ()
    %cst_6 = arith.constant dense<0.000000e+00> : vector<2x8x8xf32>
    %13 = tpu.matmul %8, %10, %cst_6 {dimension_numbers = #tpu.dot_dimension_numbers<[2], [2], [1], [1], [0, 0, 0, 1, 1, 1], [0], [0]>} : vector<2x8x32xf32>, vector<2x8x32xf32>, vector<2x8x8xf32> -> vector<2x8x8xf32>
    "tpu.trace_stop"() : () -> ()
    %cst_7 = arith.constant 0.176776692 : f32
    %14 = vector.broadcast %cst_7 : f32 to vector<2x8x8xf32>
    %15 = arith.mulf %13, %14 : vector<2x8x8xf32>
    %c0_8 = arith.constant 0 : index
    %c0_9 = arith.constant 0 : index
    %c0_10 = arith.constant 0 : index
    %16 = vector.load %arg2[%c0_8, %c0_9, %c0_10] : memref<2x1x8xf32, #tpu.memory_space<vmem>>, vector<2x1x8xf32>
    %17 = vector.broadcast %16 : vector<2x1x8xf32> to vector<2x8x8xf32>
    %18 = arith.addf %15, %17 : vector<2x8x8xf32>
    %cst_11 = arith.constant dense<0xFF800000> : vector<2x8xf32>
    %19 = vector.multi_reduction <maximumf>, %18, %cst_11 [2] : vector<2x8x8xf32> to vector<2x8xf32>
    %20 = vector.shape_cast %19 : vector<2x8xf32> to vector<2x8x1xf32>
    %21 = vector.broadcast %20 : vector<2x8x1xf32> to vector<2x8x8xf32>
    %22 = arith.subf %18, %21 : vector<2x8x8xf32>
    %23 = math.exp %22 : vector<2x8x8xf32>
    %cst_12 = arith.constant dense<0.000000e+00> : vector<2x8xf32>
    %24 = vector.multi_reduction <add>, %23, %cst_12 [2] : vector<2x8x8xf32> to vector<2x8xf32>
    %25 = vector.shape_cast %24 : vector<2x8xf32> to vector<2x8x1xf32>
    "tpu.trace_start"() <{level = 10 : i32, message = "bqk,bkd->bqd"}> : () -> ()
    %cst_13 = arith.constant dense<0.000000e+00> : vector<2x8x32xf32>
    %26 = tpu.matmul %23, %12, %cst_13 {dimension_numbers = #tpu.dot_dimension_numbers<[2], [1], [1], [2], [0, 0, 0, 1, 1, 2], [0], [0]>} : vector<2x8x8xf32>, vector<2x8x32xf32>, vector<2x8x32xf32> -> vector<2x8x32xf32>
    "tpu.trace_stop"() : () -> ()
    %27 = tpu.reciprocal %25 : vector<2x8x1xf32> -> vector<2x8x1xf32>
    %28 = vector.broadcast %27 : vector<2x8x1xf32> to vector<2x8x32xf32>
    %29 = arith.mulf %26, %28 : vector<2x8x32xf32>
    %c0_14 = arith.constant 0 : index
    %c0_15 = arith.constant 0 : index
    %c0_16 = arith.constant 0 : index
    %30 = vector.load %arg5[%c0_14, %c0_15, %c0_16] : memref<2x8x32xf32, #tpu.memory_space<vmem>>, vector<2x8x32xf32>
    tpu.vector_store %arg5[%c0_14, %c0_15, %c0_16], %29 {strides = array<i32>} : memref<2x8x32xf32, #tpu.memory_space<vmem>>, vector<2x8x32xf32>,
    return
  }
  func.func @transform_0(%arg0: i32) -> (i32, i32, i32) {
    %c0_i32 = arith.constant 0 : i32
    %c0_i32_0 = arith.constant 0 : i32
    %c0_i32_1 = arith.constant 0 : i32
    return %arg0, %c0_i32, %c0_i32_0 : i32, i32, i32
  }
  func.func @transform_1(%arg0: i32) -> (i32, i32, i32) {
    %c0_i32 = arith.constant 0 : i32
    %c0_i32_0 = arith.constant 0 : i32
    %c0_i32_1 = arith.constant 0 : i32
    return %arg0, %c0_i32, %c0_i32_0 : i32, i32, i32
  }
  func.func @transform_2(%arg0: i32) -> (i32, i32) {
    %c0_i32 = arith.constant 0 : i32
    %c0_i32_0 = arith.constant 0 : i32
    %c0_i32_1 = arith.constant 0 : i32
    return %c0_i32, %c0_i32_0 : i32, i32
  }
  func.func @transform_3(%arg0: i32) -> (i32, i32) {
    %c0_i32 = arith.constant 0 : i32
    %c0_i32_0 = arith.constant 0 : i32
    %c0_i32_1 = arith.constant 0 : i32
    return %c0_i32, %c0_i32_0 : i32, i32
  }
  func.func @transform_4(%arg0: i32) -> (i32, i32, i32) {
    %c0_i32 = arith.constant 0 : i32
    %c0_i32_0 = arith.constant 0 : i32
    %c0_i32_1 = arith.constant 0 : i32
    return %arg0, %c0_i32, %c0_i32_0 : i32, i32, i32
  }
}

</mosaic_0001>

<llo_original>
// kernel: changed_value_attention.1
$region0: #{changed_value_attention.1}
  #allocation0 [shape = 'u32[]', space=smem, size = 0x4, offset = 0x4, fixed_abs, tag = 'smem constant byte address 0x4 - core index']
  #allocation1 [shape = 'u32[144,128]{1,0:T(1,128)}', space=vmem, size = 0x12000, scoped, tag = 'internal scratch']
  %s0 = inlined_call_operand.vmem [shape: f32[2,8,32], index: 0, kind: input, shape index: {}]
  %s1 = inlined_call_operand.vmem [shape: f32[2,1,8], index: 1, kind: input, shape index: {}]
  %s2 = inlined_call_operand.vmem [shape: f32[96,32], index: 2, kind: input, shape index: {}]
  %s3 = inlined_call_operand.vmem [shape: f32[1,96], index: 3, kind: input, shape index: {}]
  %s4 = inlined_call_operand.hbm [shape: f32[2,8,32], index: 4, kind: output, shape index: {}]
  %s5 = sld [smem:[#allocation0]]
  $region26: #{changed_value_attention.1} parent=0
    _
  %s7 = ssub.s32 1, %s5
  %s8 = scalar_select 0, %s7, %s5
  $region1: #{changed_value_attention.1} parent=0
    #allocation2 [shape = 'u8[8192]{0}', space=vmem, size = 0x2000, scoped, tag = 'output window, operand 0, single buffered']
    #allocation3 [shape = 's32[1]{0}', space=sflag, size = 0x4, scoped, tag = 'scoped memory for changed_value_attention.1']
    %9 = vsyncpa [#allocation3], 0
    // Predicated region
    $region2: #{changed_value_attention.1} parent=1 // pred_check
      _
    $region3: #{changed_value_attention.1} parent=1 // pred_check_branch
      %11 = sbr.rel (0) target = $region5
    $region4: #{changed_value_attention.1} parent=1 // pred_region
      _
    $region5: #{changed_value_attention.1} parent=1 // pred_fallthru
      _
    // Predicated region
    $region6: #{changed_value_attention.1} parent=1 // pred_check
      _
    $region7: #{changed_value_attention.1} parent=1 // pred_check_branch
      %13 = sbr.rel (0) target = $region9
    $region8: #{changed_value_attention.1} parent=1 // pred_region
      _
    $region9: #{changed_value_attention.1} parent=1 // pred_fallthru
      _
    // Predicated region
    $region10: #{changed_value_attention.1} parent=1 // pred_check
      _
    $region11: #{changed_value_attention.1} parent=1 // pred_check_branch
      %15 = sbr.rel (0) target = $region13
    $region12: #{changed_value_attention.1} parent=1 // pred_region
      _
    $region13: #{changed_value_attention.1} parent=1 // pred_fallthru
      _
    // Predicated region
    $region14: #{changed_value_attention.1} parent=1 // pred_check
      _
    $region15: #{changed_value_attention.1} parent=1 // pred_check_branch
      %17 = sbr.rel (0) target = $region17
    $region16: #{changed_value_attention.1} parent=1 // pred_region
      _
    $region17: #{changed_value_attention.1} parent=1 // pred_fallthru
      _
    %v18 = vld [vmem:[%s0] sm:$0xff]
    %v19 = vld [vmem:[%s0 + $0x8] sm:$0xff]
    %v20 = vld [vmem:[%s2] sm:$0xff]
    %v21 = vld [vmem:[%s2 + $0x8] sm:$0xff]
    %v22 = vld [vmem:[%s2 + $0x10] sm:$0xff]
    %v23 = vld [vmem:[%s2 + $0x18] sm:$0xff]
    %v24 = vld [vmem:[%s2 + $0x20] sm:$0xff]
    %v25 = vld [vmem:[%s2 + $0x28] sm:$0xff]
    %v26 = vld [vmem:[%s2 + $0x30] sm:$0xff]
    %v27 = vld [vmem:[%s2 + $0x38] sm:$0xff]
    %v28 = vld [vmem:[%s2 + $0x40] sm:$0xff]
    %v29 = vld [vmem:[%s2 + $0x48] sm:$0xff]
    %v30 = vld [vmem:[%s2 + $0x50] sm:$0xff]
    %v31 = vld [vmem:[%s2 + $0x58] sm:$0xff]
    %v32 = vld [vmem:[%s3] sm:$0x1]
    %v34 = vlaneseq
    %v35 = vshrl.u32 %v34, 7
    %v36 = vsub.s32 0, %v35
    %v37 = vrot.slane %v32, %v36
    %vm39 = vcmask 261120
    %v41 = vsel %vm39, %v18, 0
    %v44 = vsel %vm39, %v19, 0
    %v47 = vsel %vm39, %v20, 0
    %v50 = vsel %vm39, %v21, 0
    %v53 = vsel %vm39, %v22, 0
    %v56 = vsel %vm39, %v23, 0
    %v59 = vsel %vm39, %v24, 0
    %v62 = vsel %vm39, %v25, 0
    %v65 = vsel %vm39, %v26, 0
    %v68 = vsel %vm39, %v27, 0
    %v71 = vsel %vm39, %v28, 0
    %v74 = vsel %vm39, %v29, 0
    %v77 = vsel %vm39, %v30, 0
    %v80 = vsel %vm39, %v31, 0
    %82 = vmatprep.subr.mxu0 0.0
    %83 = vmatpush1.xpose.msra.mxu0 0.0
    %84 = vmatprep.subr.mxu0 0.0
    %85 = vmatpush1.xpose.msra.mxu0 0.0
    %86 = vmatprep.subr.mxu0 0.0
    %87 = vmatpush1.xpose.msra.mxu0 0.0
    %88 = vmatprep.subr.mxu0 0.0
    %89 = vmatpush1.xpose.msra.mxu0 0.0
    %90 = vmatprep.subr.mxu0 0.0
    %91 = vmatpush1.xpose.msra.mxu0 %v80
    %92 = vmatprep.subr.mxu0 0.0
    %93 = vmatpush1.xpose.msra.mxu0 %v77
    %94 = vmatprep.subr.mxu0 0.0
    %95 = vmatpush1.xpose.msra.mxu0 %v74
    %96 = vmatprep.subr.mxu0 0.0
    %97 = vmatpush1.xpose.msra.mxu0 %v71
    %98 = vmatprep.subr.mxu0 0.0
    %99 = vmatpush1.xpose.msra.mxu0 %v68
    %100 = vmatprep.subr.mxu0 0.0
    %101 = vmatpush1.xpose.msra.mxu0 %v65
    %102 = vmatprep.subr.mxu0 0.0
    %103 = vmatpush1.xpose.msra.mxu0 %v62
    %104 = vmatprep.subr.mxu0 0.0
    %105 = vmatpush1.xpose.msra.mxu0 %v59
    %106 = vmatprep.subr.mxu0 0.0
    %107 = vmatpush1.xpose.msra.mxu0 %v56
    %108 = vmatprep.subr.mxu0 0.0
    %109 = vmatpush1.xpose.msra.mxu0 %v53
    %110 = vmatprep.subr.mxu0 0.0
    %111 = vmatpush1.xpose.msra.mxu0 %v50
    %112 = vmatprep.subr.mxu0 0.0
    %113 = vmatpush1.xpose.msra.mxu0 %v47
    %114 = vmatprep.subr.mxu0 0.0
    %115 = vmatpush2.xpose.msra.mxu0 0.0
    %116 = vmatprep.subr.mxu0 0.0
    %117 = vmatpush2.xpose.msra.mxu0 0.0
    %118 = vmatprep.subr.mxu0 0.0
    %119 = vmatpush2.xpose.msra.mxu0 0.0
    %120 = vmatprep.subr.mxu0 0.0
    %121 = vmatpush2.xpose.msra.mxu0 0.0
    %122 = vmatprep.subr.mxu0 0.0
    %123 = vmatpush2.xpose.msra.mxu0 0.0
    %124 = vmatprep.subr.mxu0 0.0
    %125 = vmatpush2.xpose.msra.mxu0 0.0
    %126 = vmatprep.subr.mxu0 0.0
    %127 = vmatpush2.xpose.msra.mxu0 0.0
    %128 = vmatprep.subr.mxu0 0.0
    %129 = vmatpush2.xpose.msra.mxu0 0.0
    %130 = vmatprep.subr.mxu0 0.0
    %131 = vmatpush2.xpose.msra.mxu0 0.0
    %132 = vmatprep.subr.mxu0 0.0
    %133 = vmatpush2.xpose.msra.mxu0 0.0
    %134 = vmatprep.subr.mxu0 0.0
    %135 = vmatpush2.xpose.msra.mxu0 0.0
    %136 = vmatprep.subr.mxu0 0.0
    %137 = vmatpush2.xpose.msra.mxu0 0.0
    %138 = vmatprep.subr.mxu0 0.0
    %139 = vmatpush2.xpose.msra.mxu0 0.0
    %140 = vmatprep.subr.mxu0 0.0
    %141 = vmatpush2.xpose.msra.mxu0 0.0
    %142 = vmatprep.subr.mxu0 0.0
    %143 = vmatpush2.xpose.msra.mxu0 0.0
    %144 = vmatprep.subr.mxu0 0.0
    %145 = vmatpush2.xpose.msra.mxu0 0.0
    %146 = vmatprep.mubr.f32.mxu0 0.0
    %147 = vmatmul.mubr.f32.gmra.mxu0 %v41
    %v148 = vpop.f32.mrf.mxu0
    %v149 = vadd.f32 %v37, %v148
    %v150 = vpop.f32.mrf.mxu0
    %151 = vmatprep.mubr.f32.mxu0 0.0
    %152 = vmatmul.mubr.f32.gmra.mxu0 %v44
    %v153 = vpop.f32.mrf.mxu0
    %v154 = vadd.f32 %v37, %v153
    %v155 = vpop.f32.mrf.mxu0
    %156 = vdwg.mxu0
    %158 = vrot.lane.b32.xlu0 %v149, 96
    %v159 = vpop.permute.xlu0 %158
    %v160 = vsel %vm39, %v149, 0
    %v162 = vsel %vm39, %v159, 0
    %164 = vmatprep.subr.mxu0 0.0
    %165 = vmatpush1.xpose.msra.mxu0 0.0
    %166 = vmatprep.subr.mxu0 0.0
    %167 = vmatpush1.xpose.msra.mxu0 0.0
    %168 = vmatprep.subr.mxu0 0.0
    %169 = vmatpush1.xpose.msra.mxu0 0.0
    %170 = vmatprep.subr.mxu0 0.0
    %171 = vmatpush1.xpose.msra.mxu0 0.0
    %172 = vmatprep.subr.mxu0 0.0
    %173 = vmatpush1.xpose.msra.mxu0 0.0
    %174 = vmatprep.subr.mxu0 0.0
    %175 = vmatpush1.xpose.msra.mxu0 0.0
    %176 = vmatprep.subr.mxu0 0.0
    %177 = vmatpush1.xpose.msra.mxu0 0.0
    %178 = vmatprep.subr.mxu0 0.0
    %179 = vmatpush1.xpose.msra.mxu0 0.0
    %180 = vmatprep.subr.mxu0 0.0
    %181 = vmatpush1.xpose.msra.mxu0 0.0
    %182 = vmatprep.subr.mxu0 0.0
    %183 = vmatpush1.xpose.msra.mxu0 0.0
    %184 = vmatprep.subr.mxu0 0.0
    %185 = vmatpush1.xpose.msra.mxu0 0.0
    %186 = vmatprep.subr.mxu0 0.0
    %187 = vmatpush1.xpose.msra.mxu0 0.0
    %188 = vmatprep.subr.mxu0 0.0
    %189 = vmatpush1.xpose.msra.mxu0 0.0
    %190 = vmatprep.subr.mxu0 0.0
    %191 = vmatpush1.xpose.msra.mxu0 0.0
    %192 = vmatprep.subr.mxu0 0.0
    %193 = vmatpush1.xpose.msra.mxu0 0.0
    %194 = vmatprep.subr.mxu0 0.0
    %195 = vmatpush1.xpose.msra.mxu0 %v162
    %196 = vmatprep.subr.mxu0 0.0
    %197 = vmatpush2.xpose.msra.mxu0 0.0
    %198 = vmatprep.subr.mxu0 0.0
    %199 = vmatpush2.xpose.msra.mxu0 0.0
    %200 = vmatprep.subr.mxu0 0.0
    %201 = vmatpush2.xpose.msra.mxu0 0.0
    %202 = vmatprep.subr.mxu0 0.0
    %203 = vmatpush2.xpose.msra.mxu0 0.0
    %204 = vmatprep.subr.mxu0 0.0
    %205 = vmatpush2.xpose.msra.mxu0 0.0
    %206 = vmatprep.subr.mxu0 0.0
    %207 = vmatpush2.xpose.msra.mxu0 0.0
    %208 = vmatprep.subr.mxu0 0.0
    %209 = vmatpush2.xpose.msra.mxu0 0.0
    %210 = vmatprep.subr.mxu0 0.0
    %211 = vmatpush2.xpose.msra.mxu0 0.0
    %212 = vmatprep.subr.mxu0 0.0
    %213 = vmatpush2.xpose.msra.mxu0 0.0
    %214 = vmatprep.subr.mxu0 0.0
    %215 = vmatpush2.xpose.msra.mxu0 0.0
    %216 = vmatprep.subr.mxu0 0.0
    %217 = vmatpush2.xpose.msra.mxu0 0.0
    %218 = vmatprep.subr.mxu0 0.0
    %219 = vmatpush2.xpose.msra.mxu0 0.0
    %220 = vmatprep.subr.mxu0 0.0
    %221 = vmatpush2.xpose.msra.mxu0 0.0
    %222 = vmatprep.subr.mxu0 0.0
    %223 = vmatpush2.xpose.msra.mxu0 0.0
    %224 = vmatprep.subr.mxu0 0.0
    %225 = vmatpush2.xpose.msra.mxu0 0.0
    %226 = vmatprep.subr.mxu0 0.0
    %227 = vmatpush2.xpose.msra.mxu0 0.0
    %228 = vmatprep.mubr.f32.mxu0 0.0
    %229 = vmatmul.mubr.f32.gmra.mxu0 %v160
    %v230 = vpop.f32.mrf.mxu0
    %v231 = vadd.f32 0.0, %v230
    %v232 = vpop.f32.mrf.mxu0
    %233 = vdwg.mxu0
    %235 = vrot.lane.b32.xlu0 %v154, 96
    %v236 = vpop.permute.xlu0 %235
    %v237 = vsel %vm39, %v154, 0
    %v239 = vsel %vm39, %v236, 0
    %241 = vmatprep.subr.mxu0 0.0
    %242 = vmatpush1.xpose.msra.mxu0 0.0
    %243 = vmatprep.subr.mxu0 0.0
    %244 = vmatpush1.xpose.msra.mxu0 0.0
    %245 = vmatprep.subr.mxu0 0.0
    %246 = vmatpush1.xpose.msra.mxu0 0.0
    %247 = vmatprep.subr.mxu0 0.0
    %248 = vmatpush1.xpose.msra.mxu0 0.0
    %249 = vmatprep.subr.mxu0 0.0
    %250 = vmatpush1.xpose.msra.mxu0 0.0
    %251 = vmatprep.subr.mxu0 0.0
    %252 = vmatpush1.xpose.msra.mxu0 0.0
    %253 = vmatprep.subr.mxu0 0.0
    %254 = vmatpush1.xpose.msra.mxu0 0.0
    %255 = vmatprep.subr.mxu0 0.0
    %256 = vmatpush1.xpose.msra.mxu0 0.0
    %257 = vmatprep.subr.mxu0 0.0
    %258 = vmatpush1.xpose.msra.mxu0 0.0
    %259 = vmatprep.subr.mxu0 0.0
    %260 = vmatpush1.xpose.msra.mxu0 0.0
    %261 = vmatprep.subr.mxu0 0.0
    %262 = vmatpush1.xpose.msra.mxu0 0.0
    %263 = vmatprep.subr.mxu0 0.0
    %264 = vmatpush1.xpose.msra.mxu0 0.0
    %265 = vmatprep.subr.mxu0 0.0
    %266 = vmatpush1.xpose.msra.mxu0 0.0
    %267 = vmatprep.subr.mxu0 0.0
    %268 = vmatpush1.xpose.msra.mxu0 0.0
    %269 = vmatprep.subr.mxu0 0.0
    %270 = vmatpush1.xpose.msra.mxu0 0.0
    %271 = vmatprep.subr.mxu0 0.0
    %272 = vmatpush1.xpose.msra.mxu0 %v239
    %273 = vmatprep.subr.mxu0 0.0
    %274 = vmatpush2.xpose.msra.mxu0 0.0
    %275 = vmatprep.subr.mxu0 0.0
    %276 = vmatpush2.xpose.msra.mxu0 0.0
    %277 = vmatprep.subr.mxu0 0.0
    %278 = vmatpush2.xpose.msra.mxu0 0.0
    %279 = vmatprep.subr.mxu0 0.0
    %280 = vmatpush2.xpose.msra.mxu0 0.0
    %281 = vmatprep.subr.mxu0 0.0
    %282 = vmatpush2.xpose.msra.mxu0 0.0
    %283 = vmatprep.subr.mxu0 0.0
    %284 = vmatpush2.xpose.msra.mxu0 0.0
    %285 = vmatprep.subr.mxu0 0.0
    %286 = vmatpush2.xpose.msra.mxu0 0.0
    %287 = vmatprep.subr.mxu0 0.0
    %288 = vmatpush2.xpose.msra.mxu0 0.0
    %289 = vmatprep.subr.mxu0 0.0
    %290 = vmatpush2.xpose.msra.mxu0 0.0
    %291 = vmatprep.subr.mxu0 0.0
    %292 = vmatpush2.xpose.msra.mxu0 0.0
    %293 = vmatprep.subr.mxu0 0.0
    %294 = vmatpush2.xpose.msra.mxu0 0.0
    %295 = vmatprep.subr.mxu0 0.0
    %296 = vmatpush2.xpose.msra.mxu0 0.0
    %297 = vmatprep.subr.mxu0 0.0
    %298 = vmatpush2.xpose.msra.mxu0 0.0
    %299 = vmatprep.subr.mxu0 0.0
    %300 = vmatpush2.xpose.msra.mxu0 0.0
    %301 = vmatprep.subr.mxu0 0.0
    %302 = vmatpush2.xpose.msra.mxu0 0.0
    %303 = vmatprep.subr.mxu0 0.0
    %304 = vmatpush2.xpose.msra.mxu0 0.0
    %305 = vmatprep.mubr.f32.mxu0 0.0
    %306 = vmatmul.mubr.f32.gmra.mxu0 %v237
    %v307 = vpop.f32.mrf.mxu0
    %v308 = vadd.f32 0.0, %v307
    %v309 = vpop.f32.mrf.mxu0
    %310 = vdwg.mxu0
    %v311 = vmul.f32 %v231, 0.17677669
    %v312 = vmul.f32 %v308, 0.17677669
    %v313 = vld [vmem:[%s1] sm:$0x1]
    %v314 = vld [vmem:[%s1 + $0x1] sm:$0x1]
    %v317 = vlaneseq
    %v318 = vshrl.u32 %v317, 7
    %v319 = vsub.s32 0, %v318
    %v320 = vrot.slane %v313, %v319
    %v321 = vlaneseq
    %v322 = vshrl.u32 %v321, 7
    %v323 = vsub.s32 0, %v322
    %v324 = vrot.slane %v314, %v323
    %v327 = vadd.f32 %v311, %v320
    %v328 = vadd.f32 %v312, %v324
    %vm329 = vcmask 64512
    %v330 = vsel %vm329, %v327, -inf
    %331 = vmax.xlane.f32.xlu0 %v330
    %v332 = vpop.xlane.xlu0 %331
    %v333 = vsel %vm329, %v328, -inf
    %334 = vmax.xlane.f32.xlu0 %v333
    %v335 = vpop.xlane.xlu0 %334
    %v336 = vsub.f32 %v327, %v332
    %v337 = vsub.f32 %v328, %v335
    %v338 = vmul.f32 %v336, 1.442695
    %v339 = vpow.pop %v338
    %v340 = vmul.f32 %v337, 1.442695
    %v341 = vpow.pop %v340
    %v342 = vsel %vm329, %v339, 0.0
    %343 = vadd.xlane.f32.xlu0 %v342
    %v344 = vpop.xlane.xlu0 %343
    %v345 = vsel %vm329, %v341, 0.0
    %346 = vadd.xlane.f32.xlu0 %v345
    %v347 = vpop.xlane.xlu0 %346
    %348 = vrot.lane.b32.xlu0 %v149, 64
    %v349 = vpop.permute.xlu0 %348
    %v352 = vsel %vm329, %v339, 0
    %354 = vmatprep.subr.mxu0 0.0
    %355 = vmatpush1.msra.mxu0 0.0
    %356 = vmatprep.subr.mxu0 0.0
    %357 = vmatpush1.msra.mxu0 0.0
    %358 = vmatprep.subr.mxu0 0.0
    %359 = vmatpush1.msra.mxu0 0.0
    %360 = vmatprep.subr.mxu0 0.0
    %361 = vmatpush1.msra.mxu0 0.0
    %362 = vmatprep.subr.mxu0 0.0
    %363 = vmatpush1.msra.mxu0 0.0
    %364 = vmatprep.subr.mxu0 0.0
    %365 = vmatpush1.msra.mxu0 0.0
    %366 = vmatprep.subr.mxu0 0.0
    %367 = vmatpush1.msra.mxu0 0.0
    %368 = vmatprep.subr.mxu0 0.0
    %369 = vmatpush1.msra.mxu0 0.0
    %370 = vmatprep.subr.mxu0 0.0
    %371 = vmatpush1.msra.mxu0 0.0
    %372 = vmatprep.subr.mxu0 0.0
    %373 = vmatpush1.msra.mxu0 0.0
    %374 = vmatprep.subr.mxu0 0.0
    %375 = vmatpush1.msra.mxu0 0.0
    %376 = vmatprep.subr.mxu0 0.0
    %377 = vmatpush1.msra.mxu0 0.0
    %378 = vmatprep.subr.mxu0 0.0
    %379 = vmatpush1.msra.mxu0 0.0
    %380 = vmatprep.subr.mxu0 0.0
    %381 = vmatpush1.msra.mxu0 0.0
    %382 = vmatprep.subr.mxu0 0.0
    %383 = vmatpush1.msra.mxu0 0.0
    %384 = vmatprep.subr.mxu0 0.0
    %385 = vmatpush1.msra.mxu0 %v349
    %386 = vmatprep.subr.mxu0 0.0
    %387 = vmatpush2.msra.mxu0 0.0
    %388 = vmatprep.subr.mxu0 0.0
    %389 = vmatpush2.msra.mxu0 0.0
    %390 = vmatprep.subr.mxu0 0.0
    %391 = vmatpush2.msra.mxu0 0.0
    %392 = vmatprep.subr.mxu0 0.0
    %393 = vmatpush2.msra.mxu0 0.0
    %394 = vmatprep.subr.mxu0 0.0
    %395 = vmatpush2.msra.mxu0 0.0
    %396 = vmatprep.subr.mxu0 0.0
    %397 = vmatpush2.msra.mxu0 0.0
    %398 = vmatprep.subr.mxu0 0.0
    %399 = vmatpush2.msra.mxu0 0.0
    %400 = vmatprep.subr.mxu0 0.0
    %401 = vmatpush2.msra.mxu0 0.0
    %402 = vmatprep.subr.mxu0 0.0
    %403 = vmatpush2.msra.mxu0 0.0
    %404 = vmatprep.subr.mxu0 0.0
    %405 = vmatpush2.msra.mxu0 0.0
    %406 = vmatprep.subr.mxu0 0.0
    %407 = vmatpush2.msra.mxu0 0.0
    %408 = vmatprep.subr.mxu0 0.0
    %409 = vmatpush2.msra.mxu0 0.0
    %410 = vmatprep.subr.mxu0 0.0
    %411 = vmatpush2.msra.mxu0 0.0
    %412 = vmatprep.subr.mxu0 0.0
    %413 = vmatpush2.msra.mxu0 0.0
    %414 = vmatprep.subr.mxu0 0.0
    %415 = vmatpush2.msra.mxu0 0.0
    %416 = vmatprep.subr.mxu0 0.0
    %417 = vmatpush2.msra.mxu0 0.0
    %418 = vmatprep.mubr.f32.mxu0 0.0
    %419 = vmatmul.mubr.f32.gmra.mxu0 %v352
    %v420 = vpop.f32.mrf.mxu0
    %v421 = vadd.f32 0.0, %v420
    %v422 = vpop.f32.mrf.mxu0
    %423 = vdwg.mxu0
    %424 = vrot.lane.b32.xlu0 %v154, 64
    %v425 = vpop.permute.xlu0 %424
    %v428 = vsel %vm329, %v341, 0
    %430 = vmatprep.subr.mxu0 0.0
    %431 = vmatpush1.msra.mxu0 0.0
    %432 = vmatprep.subr.mxu0 0.0
    %433 = vmatpush1.msra.mxu0 0.0
    %434 = vmatprep.subr.mxu0 0.0
    %435 = vmatpush1.msra.mxu0 0.0
    %436 = vmatprep.subr.mxu0 0.0
    %437 = vmatpush1.msra.mxu0 0.0
    %438 = vmatprep.subr.mxu0 0.0
    %439 = vmatpush1.msra.mxu0 0.0
    %440 = vmatprep.subr.mxu0 0.0
    %441 = vmatpush1.msra.mxu0 0.0
    %442 = vmatprep.subr.mxu0 0.0
    %443 = vmatpush1.msra.mxu0 0.0
    %444 = vmatprep.subr.mxu0 0.0
    %445 = vmatpush1.msra.mxu0 0.0
    %446 = vmatprep.subr.mxu0 0.0
    %447 = vmatpush1.msra.mxu0 0.0
    %448 = vmatprep.subr.mxu0 0.0
    %449 = vmatpush1.msra.mxu0 0.0
    %450 = vmatprep.subr.mxu0 0.0
    %451 = vmatpush1.msra.mxu0 0.0
    %452 = vmatprep.subr.mxu0 0.0
    %453 = vmatpush1.msra.mxu0 0.0
    %454 = vmatprep.subr.mxu0 0.0
    %455 = vmatpush1.msra.mxu0 0.0
    %456 = vmatprep.subr.mxu0 0.0
    %457 = vmatpush1.msra.mxu0 0.0
    %458 = vmatprep.subr.mxu0 0.0
    %459 = vmatpush1.msra.mxu0 0.0
    %460 = vmatprep.subr.mxu0 0.0
    %461 = vmatpush1.msra.mxu0 %v425
    %462 = vmatprep.subr.mxu0 0.0
    %463 = vmatpush2.msra.mxu0 0.0
    %464 = vmatprep.subr.mxu0 0.0
    %465 = vmatpush2.msra.mxu0 0.0
    %466 = vmatprep.subr.mxu0 0.0
    %467 = vmatpush2.msra.mxu0 0.0
    %468 = vmatprep.subr.mxu0 0.0
    %469 = vmatpush2.msra.mxu0 0.0
    %470 = vmatprep.subr.mxu0 0.0
    %471 = vmatpush2.msra.mxu0 0.0
    %472 = vmatprep.subr.mxu0 0.0
    %473 = vmatpush2.msra.mxu0 0.0
    %474 = vmatprep.subr.mxu0 0.0
    %475 = vmatpush2.msra.mxu0 0.0
    %476 = vmatprep.subr.mxu0 0.0
    %477 = vmatpush2.msra.mxu0 0.0
    %478 = vmatprep.subr.mxu0 0.0
    %479 = vmatpush2.msra.mxu0 0.0
    %480 = vmatprep.subr.mxu0 0.0
    %481 = vmatpush2.msra.mxu0 0.0
    %482 = vmatprep.subr.mxu0 0.0
    %483 = vmatpush2.msra.mxu0 0.0
    %484 = vmatprep.subr.mxu0 0.0
    %485 = vmatpush2.msra.mxu0 0.0
    %486 = vmatprep.subr.mxu0 0.0
    %487 = vmatpush2.msra.mxu0 0.0
    %488 = vmatprep.subr.mxu0 0.0
    %489 = vmatpush2.msra.mxu0 0.0
    %490 = vmatprep.subr.mxu0 0.0
    %491 = vmatpush2.msra.mxu0 0.0
    %492 = vmatprep.subr.mxu0 0.0
    %493 = vmatpush2.msra.mxu0 0.0
    %494 = vmatprep.mubr.f32.mxu0 0.0
    %495 = vmatmul.mubr.f32.gmra.mxu0 %v428
    %v496 = vpop.f32.mrf.mxu0
    %v497 = vadd.f32 0.0, %v496
    %v498 = vpop.f32.mrf.mxu0
    %499 = vdwg.mxu0
    %v500 = vrcp.pop %v344
    %v501 = vrcp.pop %v347
    %v502 = vmul.f32 %v421, %v500
    %v503 = vmul.f32 %v497, %v501
    %504 = vst.msk [vmem:[#allocation2] sm:$0xff] %vm39, %v502
    %505 = vst.msk [vmem:[#allocation2 + $0x8] sm:$0xff] %vm39, %v503
    // Predicated region
    $region18: #{changed_value_attention.1} parent=1 // pred_check
      _
    $region19: #{changed_value_attention.1} parent=1 // pred_check_branch
      %507 = sbr.rel (0) target = $region21
    $region20: #{changed_value_attention.1} parent=1 // pred_region
      %s509 = ssub.s32 256, 256
      %510 = vsyncadd [#allocation3], %s509
      %s511 = sshll.u32 [#allocation2], 4
      %s512 = int_to_ptr.vmem [resolvable:$true] %s511
      %517 = dma.vmem_to_hbm [thread:$0]  %s512, 256, %s4, [#allocation3], 128, 128, 8
    $region21: #{changed_value_attention.1} parent=1 // pred_fallthru
      _
    // Predicated region
    $region22: #{changed_value_attention.1} parent=1 // pred_check
      _
    $region23: #{changed_value_attention.1} parent=1 // pred_check_branch
      %519 = sbr.rel (0) target = $region25
    $region24: #{changed_value_attention.1} parent=1 // pred_region
      %520 = dma.done [#allocation3], 256
    $region25: #{changed_value_attention.1} parent=1 // pred_fallthru
      _
    %521 = vsyncpa [#allocation3], 1

</llo_original>
